<compile_context>
chip_gen: v7x
topology: tpu7x:2x2x1
jax: 0.10.0
libtpu: 0.0.40
codegen_flags: <defaults>
</compile_context>

<pallas_src>
import jax
import jax.numpy as jnp
from jax.experimental import pallas as pl
from jax.experimental.pallas import tpu as pltpu


def _tcheby_matmul_kernel(col_ref, at_ref, bias_ref, o_ref):
    """One fused-operator matmul per grid step.

    col_ref  : [1, R, J]   im2col rows for this batch block (R = B_blk*Tout, J = Kt*c_in*N)
    at_ref   : [J, M]      fused W (x) Lap operator (resident across the grid), M = c_out*N
    bias_ref : [1, M]      bias broadcast row (bias[o] repeated over q)
    o_ref    : [1, R, M]   lane-dense output rows
    """
    acc = jnp.dot(col_ref[0], at_ref[...], preferred_element_type=jnp.float32)
    o_ref[0] = acc + bias_ref[...]


def t_cheby_conv(x, adj, weight, bias, K, Kt):
    """x: [B, c_in, N, T], adj: [N, N], weight: [c_out, K*c_in, 1, Kt] (PyTorch layout,
    input-channel index = c*K + k), bias: [c_out].  Returns [B, c_out, N, Tout]."""
    assert K >= 2, "T_cheby_conv requires K >= 2"
    B, c_in, N, T = x.shape
    c_out = weight.shape[0]
    pad = 1                                  # fixed padding=(0, 1) in the module
    Tout = T + 2 * pad - Kt + 1
    CN = c_in * N
    J = Kt * CN                              # contraction width  (192 at demo sizes)
    M = c_out * N                            # output lane width  (128 at demo sizes)

    f32 = jnp.float32
    adj_f = adj.astype(f32)
    x_f = x.astype(f32)

    # ---- batch-independent prep (hoisted out of the grid; runs once in XLA) ----
    L0 = jnp.eye(N, dtype=f32)
    Ls = [L0, adj_f]
    lp, lc = L0, adj_f
    for _ in range(2, K):
        ln = 2.0 * (adj_f @ lc) - lp
        Ls.append(ln)
        lp, lc = lc, ln
    Lap = jnp.stack(Ls, 0)                                          # [K, N, N]

    w4 = weight.reshape(c_out, c_in, K, Kt).astype(f32)             # [o, c, k, dt]
    # AT[(dt, c, n), (o, q)] = sum_k w4[o, c, k, dt] * Lap[k, q, n]
    at = jnp.einsum('ockd,kqn->dcnoq', w4, Lap).reshape(J, M)
    bias_row = jnp.repeat(bias.astype(f32), N).reshape(1, M)        # [1, o*N+q] -> bias[o]

    # ---- batch-dependent layout plumbing: im2col of the time-padded input ----
    xpad = jnp.pad(x_f, ((0, 0), (0, 0), (0, 0), (pad, pad)))       # [B, c_in, N, T+2]
    xpt = jnp.transpose(xpad, (0, 3, 1, 2))                         # [B, Tp, c_in, N]
    col = jnp.stack([xpt[:, dt:dt + Tout] for dt in range(Kt)], axis=2)   # [B,Tout,Kt,c_in,N]
    col = col.reshape(B, Tout, J)

    # Fold batch into matmul rows; keep 2 grid steps when B is even so the "parallel"
    # axis splits evenly across v7x's two TensorCores.
    num_blocks = 2 if (B % 2 == 0 and B >= 2) else 1
    B_blk = B // num_blocks
    R = B_blk * Tout
    col_blocks = col.reshape(num_blocks, R, J)

    out_rows = pl.pallas_call(
        _tcheby_matmul_kernel,
        out_shape=jax.ShapeDtypeStruct((num_blocks, R, M), f32),
        grid=(num_blocks,),
        in_specs=[
            pl.BlockSpec((1, R, J), lambda b: (b, 0, 0)),   # im2col rows for this block
            pl.BlockSpec((J, M), lambda b: (0, 0)),         # fused operator (constant block)
            pl.BlockSpec((1, M), lambda b: (0, 0)),         # bias row (constant block)
        ],
        out_specs=pl.BlockSpec((1, R, M), lambda b: (b, 0, 0)),
        compiler_params=pltpu.CompilerParams(dimension_semantics=("parallel",)),
    )(col_blocks, at, bias_row)

    # [num_blocks, B_blk*Tout, c_out*N] -> [B, Tout, c_out, N] -> [B, c_out, N, Tout]
    out = out_rows.reshape(B, Tout, c_out, N)
    return jnp.transpose(out, (0, 2, 3, 1))


def reference_forward(x, adj, weight, bias, K, Kt):
    """Pure-JAX transcription of the PyTorch forward, for validation."""
    B, c_in, N, T = x.shape
    c_out = weight.shape[0]
    L0 = jnp.eye(N, dtype=jnp.float32)
    Ls = [L0, adj]
    lp, lc = L0, adj
    for _ in range(2, K):
        ln = 2.0 * (adj @ lc) - lp
        Ls.append(ln)
        lp, lc = lc, ln
    Lap = jnp.stack(Ls, 0)                            # [K, N, N]
    Lap_t = jnp.swapaxes(Lap, -1, -2)
    xk = jnp.einsum('bcnl,knq->bckql', x, Lap_t)      # [B, C, K, N, T]
    xk = xk.reshape(B, c_in * K, N, T)
    xp = jnp.pad(xk, ((0, 0), (0, 0), (0, 0), (1, 1)))
    Tout = T + 2 - Kt + 1
    out = jnp.zeros((B, c_out, N, Tout), jnp.float32)
    for dt in range(Kt):
        out = out + jnp.einsum('bcnt,oc->bont', xp[:, :, :, dt:dt + Tout],
                               weight[:, :, 0, dt])
    return out + bias[None, :, None, None]


if __name__ == "__main__":
    B, c_in, c_out = 2, 4, 8
    num_nodes, tem_size = 16, 12
    K, Kt = 3, 3

    key = jax.random.PRNGKey(0)
    kx, ka, kw, kb = jax.random.split(key, 4)
    x = jax.random.normal(kx, (B, c_in, num_nodes, tem_size), dtype=jnp.float32)
    adj = jax.random.uniform(ka, (num_nodes, num_nodes), dtype=jnp.float32)
    weight = 0.1 * jax.random.normal(kw, (c_out, K * c_in, 1, Kt), dtype=jnp.float32)
    bias = 0.1 * jax.random.normal(kb, (c_out,), dtype=jnp.float32)

    out = t_cheby_conv(x, adj, weight, bias, K, Kt)
    out = jax.block_until_ready(out)

    assert out.shape == (B, c_out, num_nodes, tem_size)
    ref = reference_forward(x, adj, weight, bias, K, Kt)
    max_err = float(jnp.max(jnp.abs(out - ref)))
    scale = max(float(jnp.max(jnp.abs(ref))), 1.0)
    assert max_err / scale < 1e-4, f"mismatch vs reference: max abs err = {max_err}"
    print("KERNEL_OK")
</pallas_src>

<mosaic_0001>
module attributes {stable_mosaic.version = 11 : i64} {
  func.func @_tcheby_matmul_kernel(%arg0: i32, %arg1: memref<1x12x192xf32, #tpu.memory_space<vmem>>, %arg2: memref<192x128xf32, #tpu.memory_space<vmem>>, %arg3: memref<1x128xf32, #tpu.memory_space<vmem>>, %arg4: memref<1x12x128xf32, #tpu.memory_space<vmem>>) attributes {dimension_semantics = [#tpu.dimension_semantics<parallel>], iteration_bounds = array<i64: 2>, scalar_prefetch = 0 : i64, scratch_operands = 0 : i64, tpu.core_type = #tpu.core_type<tc>, window_params = [{transform_indices = @transform_0, window_bounds = array<i64: 1, 12, 192>}, {pipeline_mode = #tpu.pipeline_mode<synchronous>, transform_indices = @transform_1, window_bounds = array<i64: 192, 128>}, {pipeline_mode = #tpu.pipeline_mode<synchronous>, transform_indices = @transform_2, window_bounds = array<i64: 1, 128>}, {transform_indices = @transform_3, window_bounds = array<i64: 1, 12, 128>}]} {
    %c0 = arith.constant 0 : index
    %c0_0 = arith.constant 0 : index
    %c0_1 = arith.constant 0 : index
    %0 = vector.load %arg1[%c0, %c0_0, %c0_1] : memref<1x12x192xf32, #tpu.memory_space<vmem>>, vector<1x12x192xf32>
    %1 = vector.shape_cast %0 : vector<1x12x192xf32> to vector<12x192xf32>
    %c0_2 = arith.constant 0 : index
    %c0_3 = arith.constant 0 : index
    %2 = vector.load %arg2[%c0_2, %c0_3] : memref<192x128xf32, #tpu.memory_space<vmem>>, vector<192x128xf32>
    %cst = arith.constant dense<0.000000e+00> : vector<12x128xf32>
    %3 = tpu.matmul %1, %2, %cst {dimension_numbers = #tpu.dot_dimension_numbers<[1], [0], [0], [1], [0, 0, 1, 1], [], []>} : vector<12x192xf32>, vector<192x128xf32>, vector<12x128xf32> -> vector<12x128xf32>
    %c0_4 = arith.constant 0 : index
    %c0_5 = arith.constant 0 : index
    %4 = vector.load %arg3[%c0_4, %c0_5] : memref<1x128xf32, #tpu.memory_space<vmem>>, vector<1x128xf32>
    %5 = vector.broadcast %4 : vector<1x128xf32> to vector<12x128xf32>
    %6 = arith.addf %3, %5 : vector<12x128xf32>
    %c0_6 = arith.constant 0 : index
    %c0_7 = arith.constant 0 : index
    %c0_8 = arith.constant 0 : index
    %7 = vector.load %arg4[%c0_6, %c0_7, %c0_8] : memref<1x12x128xf32, #tpu.memory_space<vmem>>, vector<1x12x128xf32>
    %8 = vector.shape_cast %7 : vector<1x12x128xf32> to vector<12x128xf32>
    %9 = vector.shape_cast %6 : vector<12x128xf32> to vector<1x12x128xf32>
    tpu.vector_store %arg4[%c0_6, %c0_7, %c0_8], %9 {strides = array<i32>} : memref<1x12x128xf32, #tpu.memory_space<vmem>>, vector<1x12x128xf32>,
    return
  }
  func.func @transform_0(%arg0: i32) -> (i32, i32, i32) {
    %c0_i32 = arith.constant 0 : i32
    %c0_i32_0 = arith.constant 0 : i32
    %c0_i32_1 = arith.constant 0 : i32
    return %arg0, %c0_i32, %c0_i32_0 : i32, i32, i32
  }
  func.func @transform_1(%arg0: i32) -> (i32, i32) {
    %c0_i32 = arith.constant 0 : i32
    %c0_i32_0 = arith.constant 0 : i32
    %c0_i32_1 = arith.constant 0 : i32
    return %c0_i32, %c0_i32_0 : i32, i32
  }
  func.func @transform_2(%arg0: i32) -> (i32, i32) {
    %c0_i32 = arith.constant 0 : i32
    %c0_i32_0 = arith.constant 0 : i32
    %c0_i32_1 = arith.constant 0 : i32
    return %c0_i32, %c0_i32_0 : i32, i32
  }
  func.func @transform_3(%arg0: i32) -> (i32, i32, i32) {
    %c0_i32 = arith.constant 0 : i32
    %c0_i32_0 = arith.constant 0 : i32
    %c0_i32_1 = arith.constant 0 : i32
    return %arg0, %c0_i32, %c0_i32_0 : i32, i32, i32
  }
}

</mosaic_0001>

<llo_original>
// kernel: tpu_custom_call.1
$region0: #{tpu_custom_call.1}
  #allocation0 [shape = 'u32[]', space=smem, size = 0x4, offset = 0x4, fixed_abs, tag = 'smem constant byte address 0x4 - core index']
  #allocation1 [shape = 'u32[144,128]{1,0:T(1,128)}', space=vmem, size = 0x12000, scoped, tag = 'internal scratch']
  %s0 = inlined_call_operand.vmem [shape: f32[2,12,192], index: 0, kind: input, shape index: {}]
  %s1 = inlined_call_operand.hbm [shape: f32[192,128], index: 1, kind: input, shape index: {}]
  %s2 = inlined_call_operand.vmem [shape: f32[1,128], index: 2, kind: input, shape index: {}]
  %s3 = inlined_call_operand.vmem [shape: f32[2,12,128], index: 3, kind: output, shape index: {}]
  %s4 = sld [smem:[#allocation0]]
  $region49: #{tpu_custom_call.1} parent=0
    _
  %s6 = ssub.s32 1, %s4
  %s7 = scalar_select 0, %s6, %s4
  $region1: #{tpu_custom_call.1} parent=0
    #allocation2 [shape = 'u8[98304]{0}', space=vmem, size = 0x18000, scoped, tag = 'input window, operand 1, single buffered']
    #allocation3 [shape = 's32[2]{0}', space=sflag, size = 0x8, scoped, tag = 'scoped memory for tpu_custom_call.1']
    %8 = vsyncpa [#allocation3], 0
    loop: start=0, step=1, limit=4
    $region2: #{tpu_custom_call.1} parent=1 // loop_pre_header
      _
    $region3: #{tpu_custom_call.1} parent=1 // loop_header
      %s10 = sphi 0, %s14
      %p11 = scmp.ge.s32.totalorder %s10, 4
      %s20 = sphi 0, %s22
      %s23 = sphi 0, %s20
      %s24 = sphi 0, %s23
      %s40 = sphi 0, %s24
      %s44 = sphi 0, %s44
      %s46 = sphi 0, %s44
      %s47 = sphi 0, %s46
      %s61 = sphi 0, %s47
      %s65 = sphi 0, %s65
      %s67 = sphi 0, %s65
      %s68 = sphi 0, %s67
      %s82 = sphi 0, %s68
      %s88 = sphi 0, %s90
      %s91 = sphi 0, %s88
      %s92 = sphi 0, %s91
      %s108 = sphi 0, %s92
    $region4: #{tpu_custom_call.1} parent=1 // loop_header_branch
      %13 = sbr.rel (%p11) target = $region8
    $region5: #{tpu_custom_call.1} parent=1 // loop_body
      %s15 = ssub.s32 %s10, 1
      %s16 = ssub.s32 %s10, 2
      %s17 = sadd.s32 %s10, 1
      %s18 = ssub.s32 %s10, %s17
      %p19 = scmp.eq.s32.totalorder %s18, 0
      %s21 = sadd.s32 %s20, 1
      %s22 = scalar_select %p19, %s20, %s21
      %p25 = pneg %p19
      %p26 = scmp.eq.s32.totalorder %s10, 1
      %p27 = por %p25, %p26
      %p28 = scmp.ne.s32.totalorder %s20, %s23
      %p29 = scmp.eq.s32.totalorder %s10, 0
      %p30 = por %p28, %p29
      %p31 = scmp.ne.s32.totalorder %s20, %s23
      %p32 = scmp.eq.s32.totalorder %s15, 1
      %p33 = por %p31, %p32
      %p34 = scmp.ne.s32.totalorder %s23, %s24
      %p35 = scmp.eq.s32.totalorder %s15, 0
      %p36 = por %p34, %p35
      %p37 = scmp.ne.s32.totalorder %s23, %s24
      %p38 = scmp.eq.s32.totalorder %s16, 1
      %p39 = por %p37, %p38
      %p41 = scmp.ne.s32.totalorder %s24, %s40
      %p42 = scmp.eq.s32.totalorder %s16, 0
      %p43 = por %p41, %p42
      %s45 = sadd.s32 %s44, 1
      %p48 = scmp.eq.s32.totalorder %s10, 1
      %p49 = scmp.ne.s32.totalorder %s44, %s46
      %p50 = scmp.eq.s32.totalorder %s10, 0
      %p51 = por %p49, %p50
      %p52 = scmp.ne.s32.totalorder %s44, %s46
      %p53 = scmp.eq.s32.totalorder %s15, 1
      %p54 = por %p52, %p53
      %p55 = scmp.ne.s32.totalorder %s46, %s47
      %p56 = scmp.eq.s32.totalorder %s15, 0
      %p57 = por %p55, %p56
      %p58 = scmp.ne.s32.totalorder %s46, %s47
      %p59 = scmp.eq.s32.totalorder %s16, 1
      %p60 = por %p58, %p59
      %p62 = scmp.ne.s32.totalorder %s47, %s61
      %p63 = scmp.eq.s32.totalorder %s16, 0
      %p64 = por %p62, %p63
      %s66 = sadd.s32 %s65, 1
      %p69 = scmp.eq.s32.totalorder %s10, 1
      %p70 = scmp.ne.s32.totalorder %s65, %s67
      %p71 = scmp.eq.s32.totalorder %s10, 0
      %p72 = por %p70, %p71
      %p73 = scmp.ne.s32.totalorder %s65, %s67
      %p74 = scmp.eq.s32.totalorder %s15, 1
      %p75 = por %p73, %p74
      %p76 = scmp.ne.s32.totalorder %s67, %s68
      %p77 = scmp.eq.s32.totalorder %s15, 0
      %p78 = por %p76, %p77
      %p79 = scmp.ne.s32.totalorder %s67, %s68
      %p80 = scmp.eq.s32.totalorder %s16, 1
      %p81 = por %p79, %p80
      %p83 = scmp.ne.s32.totalorder %s68, %s82
      %p84 = scmp.eq.s32.totalorder %s16, 0
      %p85 = por %p83, %p84
      %s86 = ssub.s32 %s10, %s17
      %p87 = scmp.eq.s32.totalorder %s86, 0
      %s89 = sadd.s32 %s88, 1
      %s90 = scalar_select %p87, %s88, %s89
      %p93 = pneg %p87
      %p94 = scmp.eq.s32.totalorder %s10, 1
      %p95 = por %p93, %p94
      %p96 = scmp.ne.s32.totalorder %s88, %s91
      %p97 = scmp.eq.s32.totalorder %s10, 0
      %p98 = por %p96, %p97
      %p99 = scmp.ne.s32.totalorder %s88, %s91
      %p100 = scmp.eq.s32.totalorder %s15, 1
      %p101 = por %p99, %p100
      %p102 = scmp.ne.s32.totalorder %s91, %s92
      %p103 = scmp.eq.s32.totalorder %s15, 0
      %p104 = por %p102, %p103
      %p105 = scmp.ne.s32.totalorder %s91, %s92
      %p106 = scmp.eq.s32.totalorder %s16, 1
      %p107 = por %p105, %p106
      %p109 = scmp.ne.s32.totalorder %s92, %s108
      %p110 = scmp.eq.s32.totalorder %s16, 0
      %p111 = por %p109, %p110
      %p112 = scmp.le.s32.totalorder 1, %s10
      %p113 = scmp.lt.s32.totalorder %s10, 3
      %p114 = pnand %p112, %p113
      %p115 = pneg %p114
      // Predicated region
      $region9: #{tpu_custom_call.1} parent=5 // pred_check
        _
      $region10: #{tpu_custom_call.1} parent=5 // pred_check_branch
        %117 = sbr.rel (%p114) target = $region12
      $region11: #{tpu_custom_call.1} parent=5 // pred_region
        %s118 = ssub.s32 %s10, 1
        // Predicated region
        $region13: #{tpu_custom_call.1} parent=11 // pred_check
          %p119 = pneg %p57
        $region14: #{tpu_custom_call.1} parent=11 // pred_check_branch
          %121 = sbr.rel (%p119) target = $region16
        $region15: #{tpu_custom_call.1} parent=11 // pred_region
          %s123 = ssub.s32 3072, 3072
          %124 = vsyncadd [#allocation3], %s123
          %s125 = sshll.u32 [#allocation2], 4
          %s126 = int_to_ptr.vmem [resolvable:$true] %s125
          %131 = dma.hbm_to_vmem [thread:$0]  %s1, 3072, %s126, [#allocation3], 128, 128, 8
        $region16: #{tpu_custom_call.1} parent=11 // pred_fallthru
          _
        // Predicated region
        $region17: #{tpu_custom_call.1} parent=11 // pred_check
          %p132 = pneg %p78
        $region18: #{tpu_custom_call.1} parent=11 // pred_check_branch
          %134 = sbr.rel (%p132) target = $region20
        $region19: #{tpu_custom_call.1} parent=11 // pred_region
          _
        $region20: #{tpu_custom_call.1} parent=11 // pred_fallthru
          _
      $region12: #{tpu_custom_call.1} parent=5 // pred_fallthru
        _
      %p135 = scmp.lt.s32.totalorder %s10, 2
      // Predicated region
      $region21: #{tpu_custom_call.1} parent=5 // pred_check
        %p136 = pneg %p135
      $region22: #{tpu_custom_call.1} parent=5 // pred_check_branch
        %138 = sbr.rel (%p136) target = $region24
      $region23: #{tpu_custom_call.1} parent=5 // pred_region
        // Predicated region
        $region25: #{tpu_custom_call.1} parent=23 // pred_check
          %p139 = pneg %p30
        $region26: #{tpu_custom_call.1} parent=23 // pred_check_branch
          %141 = sbr.rel (%p139) target = $region28
        $region27: #{tpu_custom_call.1} parent=23 // pred_region
          %p142 = scmp.lt.s32.totalorder %s10, 1
          %s143 = scalar_select %p142, %s10, 1
          %s144 = smul.addr %s143, 4
          %s145 = smul.addr %s144, 8
          %s146 = scalar_lea.vmem %s0, %s145
        $region28: #{tpu_custom_call.1} parent=23 // pred_fallthru
          _
      $region24: #{tpu_custom_call.1} parent=5 // pred_fallthru
        _
      %p147 = scmp.le.s32.totalorder 1, %s10
      %p148 = scmp.lt.s32.totalorder %s10, 3
      %p149 = pnand %p147, %p148
      %p150 = pneg %p149
      // Predicated region
      $region29: #{tpu_custom_call.1} parent=5 // pred_check
        _
      $region30: #{tpu_custom_call.1} parent=5 // pred_check_branch
        %152 = sbr.rel (%p149) target = $region32
      $region31: #{tpu_custom_call.1} parent=5 // pred_region
        %s153 = ssub.s32 %s10, 1
        // Predicated region
        $region33: #{tpu_custom_call.1} parent=31 // pred_check
          %p154 = pneg %p57
        $region34: #{tpu_custom_call.1} parent=31 // pred_check_branch
          %156 = sbr.rel (%p154) target = $region36
        $region35: #{tpu_custom_call.1} parent=31 // pred_region
          %157 = dma.done [#allocation3], 3072
        $region36: #{tpu_custom_call.1} parent=31 // pred_fallthru
          _
        %p158 = scmp.lt.s32.totalorder %s15, 1
        %s159 = scalar_select %p158, %s15, 1
        %s160 = smul.addr %s159, 4
        %s161 = smul.addr %s160, 8
        %s162 = scalar_lea.vmem %s0, %s161
        %p163 = pneg %p36
        %p164 = pneg %p33
        %p165 = pneg %p57
        %p166 = pneg %p54
        %p167 = pneg %p78
        %p168 = pneg %p75
        %p169 = pneg %p104
        %p170 = pneg %p101
        %p171 = scmp.lt.s32.totalorder %s15, 1
        %s172 = scalar_select %p171, %s15, 1
        %s173 = smul.addr %s172, 2
        %s174 = smul.addr %s173, 8
        %s175 = scalar_lea.vmem %s3, %s174
        %p176 = scmp.lt.s32.totalorder %s15, 1
        %s177 = scalar_select %p176, %s15, 1
        %s178 = smul.addr %s177, 4
        %s179 = smul.addr %s178, 8
        %s180 = scalar_lea.vmem %s0, %s179
        %p181 = scmp.lt.s32.totalorder %s15, 1
        %s182 = scalar_select %p181, %s15, 1
        %s183 = smul.addr %s182, 2
        %s184 = smul.addr %s183, 8
        %s185 = scalar_lea.vmem %s3, %s184
        %v186 = vld [vmem:[%s180] sm:$0xff]
        %v187 = vld [vmem:[%s180 + $0x8] sm:$0xff]
        %v188 = vld [vmem:[%s180 + $0x10] sm:$0xf]
        %v189 = vld [vmem:[%s180 + $0x18] sm:$0xf]
        %v190 = vld [vmem:[#allocation2] sm:$0xff]
        %v191 = vld [vmem:[#allocation2 + $0x8] sm:$0xff]
        %v192 = vld [vmem:[#allocation2 + $0x10] sm:$0xff]
        %v193 = vld [vmem:[#allocation2 + $0x18] sm:$0xff]
        %v194 = vld [vmem:[#allocation2 + $0x20] sm:$0xff]
        %v195 = vld [vmem:[#allocation2 + $0x28] sm:$0xff]
        %v196 = vld [vmem:[#allocation2 + $0x30] sm:$0xff]
        %v197 = vld [vmem:[#allocation2 + $0x38] sm:$0xff]
        %v198 = vld [vmem:[#allocation2 + $0x40] sm:$0xff]
        %v199 = vld [vmem:[#allocation2 + $0x48] sm:$0xff]
        %v200 = vld [vmem:[#allocation2 + $0x50] sm:$0xff]
        %v201 = vld [vmem:[#allocation2 + $0x58] sm:$0xff]
        %v202 = vld [vmem:[#allocation2 + $0x60] sm:$0xff]
        %v203 = vld [vmem:[#allocation2 + $0x68] sm:$0xff]
        %v204 = vld [vmem:[#allocation2 + $0x70] sm:$0xff]
        %v205 = vld [vmem:[#allocation2 + $0x78] sm:$0xff]
        %v206 = vld [vmem:[#allocation2 + $0x80] sm:$0xff]
        %v207 = vld [vmem:[#allocation2 + $0x88] sm:$0xff]
        %v208 = vld [vmem:[#allocation2 + $0x90] sm:$0xff]
        %v209 = vld [vmem:[#allocation2 + $0x98] sm:$0xff]
        %v210 = vld [vmem:[#allocation2 + $0xa0] sm:$0xff]
        %v211 = vld [vmem:[#allocation2 + $0xa8] sm:$0xff]
        %v212 = vld [vmem:[#allocation2 + $0xb0] sm:$0xff]
        %v213 = vld [vmem:[#allocation2 + $0xb8] sm:$0xff]
        %v214 = vld [vmem:[%s2] sm:$0x1]
        %v216 = vlaneseq
        %v217 = vshrl.u32 %v216, 7
        %v218 = vsub.s32 0, %v217
        %v219 = vrot.slane %v214, %v218
        %vm221 = vcmask 523264
        %v223 = vsel %vm221, %v187, 0
        %v226 = vsel %vm221, %v189, 0
        %228 = vmatprep.subr.mxu0 0.0
        %229 = vmatpush1.msra.mxu0 %v190
        %230 = vmatprep.subr.mxu0 0.0
        %231 = vmatpush1.msra.mxu0 %v191
        %232 = vmatprep.subr.mxu0 0.0
        %233 = vmatpush1.msra.mxu0 %v192
        %234 = vmatprep.subr.mxu0 0.0
        %235 = vmatpush1.msra.mxu0 %v193
        %236 = vmatprep.subr.mxu0 0.0
        %237 = vmatpush1.msra.mxu0 %v194
        %238 = vmatprep.subr.mxu0 0.0
        %239 = vmatpush1.msra.mxu0 %v195
        %240 = vmatprep.subr.mxu0 0.0
        %241 = vmatpush1.msra.mxu0 %v196
        %242 = vmatprep.subr.mxu0 0.0
        %243 = vmatpush1.msra.mxu0 %v197
        %244 = vmatprep.subr.mxu0 0.0
        %245 = vmatpush1.msra.mxu0 %v198
        %246 = vmatprep.subr.mxu0 0.0
        %247 = vmatpush1.msra.mxu0 %v199
        %248 = vmatprep.subr.mxu0 0.0
        %249 = vmatpush1.msra.mxu0 %v200
        %250 = vmatprep.subr.mxu0 0.0
        %251 = vmatpush1.msra.mxu0 %v201
        %252 = vmatprep.subr.mxu0 0.0
        %253 = vmatpush1.msra.mxu0 %v202
        %254 = vmatprep.subr.mxu0 0.0
        %255 = vmatpush1.msra.mxu0 %v203
        %256 = vmatprep.subr.mxu0 0.0
        %257 = vmatpush1.msra.mxu0 %v204
        %258 = vmatprep.subr.mxu0 0.0
        %259 = vmatpush1.msra.mxu0 %v205
        %260 = vmatprep.subr.mxu0 0.0
        %261 = vmatpush1.msra.mxu0 %v206
        %262 = vmatprep.subr.mxu0 0.0
        %263 = vmatpush1.msra.mxu0 %v207
        %264 = vmatprep.subr.mxu0 0.0
        %265 = vmatpush1.msra.mxu0 %v208
        %266 = vmatprep.subr.mxu0 0.0
        %267 = vmatpush1.msra.mxu0 %v209
        %268 = vmatprep.subr.mxu0 0.0
        %269 = vmatpush1.msra.mxu0 %v210
        %270 = vmatprep.subr.mxu0 0.0
        %271 = vmatpush1.msra.mxu0 %v211
        %272 = vmatprep.subr.mxu0 0.0
        %273 = vmatpush1.msra.mxu0 %v212
        %274 = vmatprep.subr.mxu0 0.0
        %275 = vmatpush1.msra.mxu0 %v213
        %276 = vmatprep.subr.mxu0 0.0
        %277 = vmatpush1.msra.mxu0 0.0
        %278 = vmatprep.subr.mxu0 0.0
        %279 = vmatpush1.msra.mxu0 0.0
        %280 = vmatprep.subr.mxu0 0.0
        %281 = vmatpush1.msra.mxu0 0.0
        %282 = vmatprep.subr.mxu0 0.0
        %283 = vmatpush1.msra.mxu0 0.0
        %284 = vmatprep.subr.mxu0 0.0
        %285 = vmatpush1.msra.mxu0 0.0
        %286 = vmatprep.subr.mxu0 0.0
        %287 = vmatpush1.msra.mxu0 0.0
        %288 = vmatprep.subr.mxu0 0.0
        %289 = vmatpush1.msra.mxu0 0.0
        %290 = vmatprep.subr.mxu0 0.0
        %291 = vmatpush1.msra.mxu0 0.0
        %292 = vmatprep.mubr.f32.mxu0 %v223
        %293 = vmatmul.mubr.f32.gmra.mrb[0].mxu0 %v186
        %v294 = vpop.f32.mrb[0].mxu0
        %v295 = vadd.f32 %v219, %v294
        %v296 = vpop.f32.mrb[0].mxu0
        %297 = vmatprep.mubr.f32.mxu0 %v226
        %298 = vmatmul.mubr.f32.gmra.mrb[0].mxu0 %v188
        %v299 = vpop.f32.mrb[0].mxu0
        %v300 = vadd.f32 %v219, %v299
        %v301 = vpop.f32.mrb[0].mxu0
        %302 = vdwg.mxu0
        %303 = vst [vmem:[%s185] sm:$0xff] %v295
        %304 = vst [vmem:[%s185 + $0x8] sm:$0xf] %v300
        %p305 = scmp.lt.s32.totalorder %s15, 1
        %s306 = scalar_select %p305, %s15, 1
        %s307 = smul.addr %s306, 2
        %s308 = smul.addr %s307, 8
        %s309 = scalar_lea.vmem %s3, %s308
        // Predicated region
        $region37: #{tpu_custom_call.1} parent=31 // pred_check
          %p310 = pneg %p101
        $region38: #{tpu_custom_call.1} parent=31 // pred_check_branch
          %312 = sbr.rel (%p310) target = $region40
        $region39: #{tpu_custom_call.1} parent=31 // pred_region
          _
        $region40: #{tpu_custom_call.1} parent=31 // pred_fallthru
          _
      $region32: #{tpu_custom_call.1} parent=5 // pred_fallthru
        _
      %p313 = scmp.le.s32.totalorder 2, %s10
      // Predicated region
      $region41: #{tpu_custom_call.1} parent=5 // pred_check
        %p314 = pneg %p313
      $region42: #{tpu_custom_call.1} parent=5 // pred_check_branch
        %316 = sbr.rel (%p314) target = $region44
      $region43: #{tpu_custom_call.1} parent=5 // pred_region
        %s317 = ssub.s32 %s10, 2
        // Predicated region
        $region45: #{tpu_custom_call.1} parent=43 // pred_check
          %p318 = pneg %p107
        $region46: #{tpu_custom_call.1} parent=43 // pred_check_branch
          %320 = sbr.rel (%p318) target = $region48
        $region47: #{tpu_custom_call.1} parent=43 // pred_region
          %p321 = scmp.lt.s32.totalorder %s16, 1
          %s322 = scalar_select %p321, %s16, 1
          %s323 = smul.addr %s322, 2
          %s324 = smul.addr %s323, 8
          %s325 = scalar_lea.vmem %s3, %s324
        $region48: #{tpu_custom_call.1} parent=43 // pred_fallthru
          _
      $region44: #{tpu_custom_call.1} parent=5 // pred_fallthru
        _
    $region6: #{tpu_custom_call.1} parent=1 // loop_footer
      %s14 = sadd.s32 1, %s10
    $region7: #{tpu_custom_call.1} parent=1 // loop_footer_branch
      %9 = sbr.rel target = $region3
    $region8: #{tpu_custom_call.1} parent=1 // loop_exit
      _
    %326 = vsyncpa [#allocation3], 1
    %s327 = scalar_lea.sflag [#allocation3], 1
    %328 = vsyncpa %s327, 1

</llo_original>
